<compile_context>
chip_gen: v7x
topology: tpu7x:2x2x1
jax: 0.10.0
libtpu: 0.0.40
codegen_flags: <defaults>
</compile_context>

<pallas_src>
import functools

import jax
import jax.numpy as jnp
from jax.experimental import pallas as pl
from jax.experimental.pallas import tpu as pltpu


def _round_up(n: int, m: int) -> int:
    return ((n + m - 1) // m) * m


def _fc2_kernel(x_ref, w1_ref, b1_ref, w2_ref, b2_ref, w3_ref, b3_ref, o_ref):
    # One (TM, F0p) batch tile; weights/biases resident in VMEM across steps.
    # bf16 MXU operands, f32 accumulate / bias / ReLU.
    h1 = jnp.dot(x_ref[...], w1_ref[...], preferred_element_type=jnp.float32)
    h1 = jnp.maximum(h1 + b1_ref[...], 0.0)

    h2 = jnp.dot(h1.astype(jnp.bfloat16), w2_ref[...],
                 preferred_element_type=jnp.float32)
    h2 = jnp.maximum(h2 + b2_ref[...], 0.0)

    h3 = jnp.dot(h2.astype(jnp.bfloat16), w3_ref[...],
                 preferred_element_type=jnp.float32)
    o_ref[...] = (h3 + b3_ref[...]).astype(o_ref.dtype)


@functools.partial(jax.jit, static_argnames=("block_rows",))
def fc2_forward(x, w1, b1, w2, b2, w3, b3, *, block_rows=512):
    """Fused 3-layer MLP forward.

    x: (B, f0); weights (in, out) [= transposed nn.Linear weights];
    biases (1, out).  Returns (B, f3) float32.
    """
    B, f0 = x.shape
    f1, f2, f3 = w1.shape[1], w2.shape[1], w3.shape[1]
    f0p, f1p, f2p, f3p = (_round_up(f, 128) for f in (f0, f1, f2, f3))

    # Batch tile: multiple of 8 (sublane), capped at block_rows.
    tm = min(block_rows, _round_up(B, 8))
    bp = _round_up(B, tm)
    grid = (bp // tm,)

    # One-time zero-pad to lane-dense shapes; bf16 matmul operands, f32 biases.
    xp = jnp.pad(x.astype(jnp.bfloat16), ((0, bp - B), (0, f0p - f0)))
    w1p = jnp.pad(w1.astype(jnp.bfloat16), ((0, f0p - f0), (0, f1p - f1)))
    w2p = jnp.pad(w2.astype(jnp.bfloat16), ((0, f1p - f1), (0, f2p - f2)))
    w3p = jnp.pad(w3.astype(jnp.bfloat16), ((0, f2p - f2), (0, f3p - f3)))
    b1p = jnp.pad(b1.astype(jnp.float32), ((0, 0), (0, f1p - f1)))
    b2p = jnp.pad(b2.astype(jnp.float32), ((0, 0), (0, f2p - f2)))
    b3p = jnp.pad(b3.astype(jnp.float32), ((0, 0), (0, f3p - f3)))

    vmem = pltpu.MemorySpace.VMEM
    tiled = lambda r, c: pl.BlockSpec((r, c), lambda i: (i, 0),
                                      memory_space=vmem)
    resident = lambda r, c: pl.BlockSpec((r, c), lambda i: (0, 0),
                                         memory_space=vmem)

    out_pad = pl.pallas_call(
        _fc2_kernel,
        out_shape=jax.ShapeDtypeStruct((bp, f3p), jnp.float32),
        grid=grid,
        in_specs=[
            tiled(tm, f0p),                       # x batch tile
            resident(f0p, f1p), resident(1, f1p),  # fc1
            resident(f1p, f2p), resident(1, f2p),  # fc2
            resident(f2p, f3p), resident(1, f3p),  # fc3
        ],
        out_specs=tiled(tm, f3p),
        compiler_params=pltpu.CompilerParams(
            dimension_semantics=("parallel",)),
    )(xp, w1p, b1p, w2p, b2p, w3p, b3p)

    return out_pad[:B, :f3]


def init_fc2_params(key, feats, biases):
    """Deterministic init mimicking nn.Linear (uniform(-1/sqrt(fan_in), +)).

    Returns weights already transposed to (in, out) and biases as (1, out).
    If a bias flag is False, the bias is a zero vector (matches no-bias math).
    Note: the PyTorch module passes biases[1] for fc3 (reproduced here).
    """
    f0, f1, f2, f3 = feats
    bias_flags = (biases[0], biases[1], biases[1])   # fc3 reuses biases[1]
    dims = [(f0, f1), (f1, f2), (f2, f3)]
    params = []
    keys = jax.random.split(key, 6)
    for i, (fin, fout) in enumerate(dims):
        bound = 1.0 / jnp.sqrt(float(fin))
        w = jax.random.uniform(keys[2 * i], (fin, fout), jnp.float32,
                               minval=-bound, maxval=bound)
        if bias_flags[i]:
            b = jax.random.uniform(keys[2 * i + 1], (1, fout), jnp.float32,
                                   minval=-bound, maxval=bound)
        else:
            b = jnp.zeros((1, fout), jnp.float32)
        params.extend([w, b])
    return params


def fc2_reference(x, w1, b1, w2, b2, w3, b3):
    h = jnp.maximum(x @ w1 + b1, 0.0)
    h = jnp.maximum(h @ w2 + b2, 0.0)
    return h @ w3 + b3


if __name__ == "__main__":
    key = jax.random.PRNGKey(0)
    k_x, k_p = jax.random.split(key)

    # Small shapes consistent with the module: feats length 4, biases length 3.
    feats = (32, 64, 48, 16)
    biases = (True, True, True)
    batch = 50   # deliberately not a multiple of the batch tile

    x = jax.random.normal(k_x, (batch, feats[0]), jnp.float32)
    w1, b1, w2, b2, w3, b3 = init_fc2_params(k_p, feats, biases)

    ref = fc2_reference(x, w1, b1, w2, b2, w3, b3)

    # Single-tile path (grid=(1,)).
    out = fc2_forward(x, w1, b1, w2, b2, w3, b3)
    jax.block_until_ready(out)
    assert out.shape == (batch, feats[3])
    assert jnp.allclose(out, ref, atol=3e-2, rtol=3e-2), "mismatch (1 tile)"

    # Multi-step grid path (tm=16 -> grid=(4,), batch padded 50 -> 64).
    out_tiled = fc2_forward(x, w1, b1, w2, b2, w3, b3, block_rows=16)
    jax.block_until_ready(out_tiled)
    assert out_tiled.shape == (batch, feats[3])
    assert jnp.allclose(out_tiled, ref, atol=3e-2, rtol=3e-2), "mismatch (tiled)"

    print("KERNEL_OK")
</pallas_src>

<mosaic_0001>
module attributes {stable_mosaic.version = 11 : i64} {
  func.func @_fc2_kernel(%arg0: i32, %arg1: memref<56x128xbf16, #tpu.memory_space<vmem>>, %arg2: memref<128x128xbf16, #tpu.memory_space<vmem>>, %arg3: memref<1x128xf32, #tpu.memory_space<vmem>>, %arg4: memref<128x128xbf16, #tpu.memory_space<vmem>>, %arg5: memref<1x128xf32, #tpu.memory_space<vmem>>, %arg6: memref<128x128xbf16, #tpu.memory_space<vmem>>, %arg7: memref<1x128xf32, #tpu.memory_space<vmem>>, %arg8: memref<56x128xf32, #tpu.memory_space<vmem>>) attributes {dimension_semantics = [#tpu.dimension_semantics<parallel>], iteration_bounds = array<i64: 1>, scalar_prefetch = 0 : i64, scratch_operands = 0 : i64, tpu.core_type = #tpu.core_type<tc>, window_params = [{transform_indices = @transform_0, window_bounds = array<i64: 56, 128>}, {pipeline_mode = #tpu.pipeline_mode<synchronous>, transform_indices = @transform_1, window_bounds = array<i64: 128, 128>}, {pipeline_mode = #tpu.pipeline_mode<synchronous>, transform_indices = @transform_2, window_bounds = array<i64: 1, 128>}, {pipeline_mode = #tpu.pipeline_mode<synchronous>, transform_indices = @transform_3, window_bounds = array<i64: 128, 128>}, {pipeline_mode = #tpu.pipeline_mode<synchronous>, transform_indices = @transform_4, window_bounds = array<i64: 1, 128>}, {pipeline_mode = #tpu.pipeline_mode<synchronous>, transform_indices = @transform_5, window_bounds = array<i64: 128, 128>}, {pipeline_mode = #tpu.pipeline_mode<synchronous>, transform_indices = @transform_6, window_bounds = array<i64: 1, 128>}, {transform_indices = @transform_7, window_bounds = array<i64: 56, 128>}]} {
    %c0 = arith.constant 0 : index
    %c0_0 = arith.constant 0 : index
    %0 = vector.load %arg1[%c0, %c0_0] : memref<56x128xbf16, #tpu.memory_space<vmem>>, vector<56x128xbf16>
    %c0_1 = arith.constant 0 : index
    %c0_2 = arith.constant 0 : index
    %1 = vector.load %arg2[%c0_1, %c0_2] : memref<128x128xbf16, #tpu.memory_space<vmem>>, vector<128x128xbf16>
    %cst = arith.constant dense<0.000000e+00> : vector<56x128xf32>
    %2 = tpu.matmul %0, %1, %cst {dimension_numbers = #tpu.dot_dimension_numbers<[1], [0], [0], [1], [0, 0, 1, 1], [], []>} : vector<56x128xbf16>, vector<128x128xbf16>, vector<56x128xf32> -> vector<56x128xf32>
    %c0_3 = arith.constant 0 : index
    %c0_4 = arith.constant 0 : index
    %3 = vector.load %arg3[%c0_3, %c0_4] : memref<1x128xf32, #tpu.memory_space<vmem>>, vector<1x128xf32>
    %4 = vector.broadcast %3 : vector<1x128xf32> to vector<56x128xf32>
    %5 = arith.addf %2, %4 : vector<56x128xf32>
    %cst_5 = arith.constant 0.000000e+00 : f32
    %6 = vector.broadcast %cst_5 : f32 to vector<56x128xf32>
    %7 = arith.maximumf %5, %6 : vector<56x128xf32>
    %8 = arith.truncf %7 : vector<56x128xf32> to vector<56x128xbf16>
    %c0_6 = arith.constant 0 : index
    %c0_7 = arith.constant 0 : index
    %9 = vector.load %arg4[%c0_6, %c0_7] : memref<128x128xbf16, #tpu.memory_space<vmem>>, vector<128x128xbf16>
    %cst_8 = arith.constant dense<0.000000e+00> : vector<56x128xf32>
    %10 = tpu.matmul %8, %9, %cst_8 {dimension_numbers = #tpu.dot_dimension_numbers<[1], [0], [0], [1], [0, 0, 1, 1], [], []>} : vector<56x128xbf16>, vector<128x128xbf16>, vector<56x128xf32> -> vector<56x128xf32>
    %c0_9 = arith.constant 0 : index
    %c0_10 = arith.constant 0 : index
    %11 = vector.load %arg5[%c0_9, %c0_10] : memref<1x128xf32, #tpu.memory_space<vmem>>, vector<1x128xf32>
    %12 = vector.broadcast %11 : vector<1x128xf32> to vector<56x128xf32>
    %13 = arith.addf %10, %12 : vector<56x128xf32>
    %cst_11 = arith.constant 0.000000e+00 : f32
    %14 = vector.broadcast %cst_11 : f32 to vector<56x128xf32>
    %15 = arith.maximumf %13, %14 : vector<56x128xf32>
    %16 = arith.truncf %15 : vector<56x128xf32> to vector<56x128xbf16>
    %c0_12 = arith.constant 0 : index
    %c0_13 = arith.constant 0 : index
    %17 = vector.load %arg6[%c0_12, %c0_13] : memref<128x128xbf16, #tpu.memory_space<vmem>>, vector<128x128xbf16>
    %cst_14 = arith.constant dense<0.000000e+00> : vector<56x128xf32>
    %18 = tpu.matmul %16, %17, %cst_14 {dimension_numbers = #tpu.dot_dimension_numbers<[1], [0], [0], [1], [0, 0, 1, 1], [], []>} : vector<56x128xbf16>, vector<128x128xbf16>, vector<56x128xf32> -> vector<56x128xf32>
    %c0_15 = arith.constant 0 : index
    %c0_16 = arith.constant 0 : index
    %19 = vector.load %arg7[%c0_15, %c0_16] : memref<1x128xf32, #tpu.memory_space<vmem>>, vector<1x128xf32>
    %20 = vector.broadcast %19 : vector<1x128xf32> to vector<56x128xf32>
    %21 = arith.addf %18, %20 : vector<56x128xf32>
    %c0_17 = arith.constant 0 : index
    %c0_18 = arith.constant 0 : index
    %22 = vector.load %arg8[%c0_17, %c0_18] : memref<56x128xf32, #tpu.memory_space<vmem>>, vector<56x128xf32>
    tpu.vector_store %arg8[%c0_17, %c0_18], %21 {strides = array<i32>} : memref<56x128xf32, #tpu.memory_space<vmem>>, vector<56x128xf32>,
    return
  }
  func.func @transform_0(%arg0: i32) -> (i32, i32) {
    %c0_i32 = arith.constant 0 : i32
    %c0_i32_0 = arith.constant 0 : i32
    return %arg0, %c0_i32 : i32, i32
  }
  func.func @transform_1(%arg0: i32) -> (i32, i32) {
    %c0_i32 = arith.constant 0 : i32
    %c0_i32_0 = arith.constant 0 : i32
    %c0_i32_1 = arith.constant 0 : i32
    return %c0_i32, %c0_i32_0 : i32, i32
  }
  func.func @transform_2(%arg0: i32) -> (i32, i32) {
    %c0_i32 = arith.constant 0 : i32
    %c0_i32_0 = arith.constant 0 : i32
    %c0_i32_1 = arith.constant 0 : i32
    return %c0_i32, %c0_i32_0 : i32, i32
  }
  func.func @transform_3(%arg0: i32) -> (i32, i32) {
    %c0_i32 = arith.constant 0 : i32
    %c0_i32_0 = arith.constant 0 : i32
    %c0_i32_1 = arith.constant 0 : i32
    return %c0_i32, %c0_i32_0 : i32, i32
  }
  func.func @transform_4(%arg0: i32) -> (i32, i32) {
    %c0_i32 = arith.constant 0 : i32
    %c0_i32_0 = arith.constant 0 : i32
    %c0_i32_1 = arith.constant 0 : i32
    return %c0_i32, %c0_i32_0 : i32, i32
  }
  func.func @transform_5(%arg0: i32) -> (i32, i32) {
    %c0_i32 = arith.constant 0 : i32
    %c0_i32_0 = arith.constant 0 : i32
    %c0_i32_1 = arith.constant 0 : i32
    return %c0_i32, %c0_i32_0 : i32, i32
  }
  func.func @transform_6(%arg0: i32) -> (i32, i32) {
    %c0_i32 = arith.constant 0 : i32
    %c0_i32_0 = arith.constant 0 : i32
    %c0_i32_1 = arith.constant 0 : i32
    return %c0_i32, %c0_i32_0 : i32, i32
  }
  func.func @transform_7(%arg0: i32) -> (i32, i32) {
    %c0_i32 = arith.constant 0 : i32
    %c0_i32_0 = arith.constant 0 : i32
    return %arg0, %c0_i32 : i32, i32
  }
}

</mosaic_0001>

<llo_original>
// kernel: fc2_forward.1
$region0: #{fc2_forward.1}
  #allocation0 [shape = 'u32[]', space=smem, size = 0x4, offset = 0x4, fixed_abs, tag = 'smem constant byte address 0x4 - core index']
  #allocation1 [shape = 'u32[144,128]{1,0:T(1,128)}', space=vmem, size = 0x12000, scoped, tag = 'internal scratch']
  %s0 = inlined_call_operand.vmem [shape: bf16[56,128], index: 0, kind: input, shape index: {}]
  %s1 = inlined_call_operand.vmem [shape: bf16[128,128], index: 1, kind: input, shape index: {}]
  %s2 = inlined_call_operand.vmem [shape: f32[1,128], index: 2, kind: input, shape index: {}]
  %s3 = inlined_call_operand.vmem [shape: bf16[128,128], index: 3, kind: input, shape index: {}]
  %s4 = inlined_call_operand.vmem [shape: f32[1,128], index: 4, kind: input, shape index: {}]
  %s5 = inlined_call_operand.vmem [shape: bf16[128,128], index: 5, kind: input, shape index: {}]
  %s6 = inlined_call_operand.vmem [shape: f32[1,128], index: 6, kind: input, shape index: {}]
  %s7 = inlined_call_operand.vmem [shape: f32[56,128], index: 7, kind: output, shape index: {}]
  %s8 = sld [smem:[#allocation0]]
  $region38: #{fc2_forward.1} parent=0
    _
  %s10 = ssub.s32 1, %s8
  %s11 = scalar_select 0, %s10, %s8
  // Predicated region
  $region2: #{fc2_forward.1} parent=0 // pred_check
    _
  $region3: #{fc2_forward.1} parent=0 // pred_check_branch
    %13 = sbr.rel (0) target = $region5
  $region4: #{fc2_forward.1} parent=0 // pred_region
    _
  $region5: #{fc2_forward.1} parent=0 // pred_fallthru
    _
  // Predicated region
  $region6: #{fc2_forward.1} parent=0 // pred_check
    _
  $region7: #{fc2_forward.1} parent=0 // pred_check_branch
    %15 = sbr.rel (0) target = $region9
  $region8: #{fc2_forward.1} parent=0 // pred_region
    _
  $region9: #{fc2_forward.1} parent=0 // pred_fallthru
    _
  // Predicated region
  $region10: #{fc2_forward.1} parent=0 // pred_check
    _
  $region11: #{fc2_forward.1} parent=0 // pred_check_branch
    %17 = sbr.rel (0) target = $region13
  $region12: #{fc2_forward.1} parent=0 // pred_region
    _
  $region13: #{fc2_forward.1} parent=0 // pred_fallthru
    _
  // Predicated region
  $region14: #{fc2_forward.1} parent=0 // pred_check
    _
  $region15: #{fc2_forward.1} parent=0 // pred_check_branch
    %19 = sbr.rel (0) target = $region17
  $region16: #{fc2_forward.1} parent=0 // pred_region
    _
  $region17: #{fc2_forward.1} parent=0 // pred_fallthru
    _
  // Predicated region
  $region18: #{fc2_forward.1} parent=0 // pred_check
    _
  $region19: #{fc2_forward.1} parent=0 // pred_check_branch
    %21 = sbr.rel (0) target = $region21
  $region20: #{fc2_forward.1} parent=0 // pred_region
    _
  $region21: #{fc2_forward.1} parent=0 // pred_fallthru
    _
  // Predicated region
  $region22: #{fc2_forward.1} parent=0 // pred_check
    _
  $region23: #{fc2_forward.1} parent=0 // pred_check_branch
    %23 = sbr.rel (0) target = $region25
  $region24: #{fc2_forward.1} parent=0 // pred_region
    _
  $region25: #{fc2_forward.1} parent=0 // pred_fallthru
    _
  // Predicated region
  $region26: #{fc2_forward.1} parent=0 // pred_check
    _
  $region27: #{fc2_forward.1} parent=0 // pred_check_branch
    %25 = sbr.rel (0) target = $region29
  $region28: #{fc2_forward.1} parent=0 // pred_region
    _
  $region29: #{fc2_forward.1} parent=0 // pred_fallthru
    _
  %v27 = vld [vmem:[%s0] sm:$0xf]
  %v28 = vld [vmem:[%s0 + $0x4] sm:$0xf]
  %v29 = vld [vmem:[%s0 + $0x8] sm:$0xf]
  %v30 = vld [vmem:[%s0 + $0xc] sm:$0xf]
  %v31 = vld [vmem:[%s0 + $0x10] sm:$0xf]
  %v32 = vld [vmem:[%s0 + $0x14] sm:$0xf]
  %v33 = vld [vmem:[%s0 + $0x18] sm:$0xf]
  %v34 = vld [vmem:[%s1] sm:$0xf]
  %v35 = vld [vmem:[%s1 + $0x4] sm:$0xf]
  %v36 = vld [vmem:[%s1 + $0x8] sm:$0xf]
  %v37 = vld [vmem:[%s1 + $0xc] sm:$0xf]
  %v38 = vld [vmem:[%s1 + $0x10] sm:$0xf]
  %v39 = vld [vmem:[%s1 + $0x14] sm:$0xf]
  %v40 = vld [vmem:[%s1 + $0x18] sm:$0xf]
  %v41 = vld [vmem:[%s1 + $0x1c] sm:$0xf]
  %v42 = vld [vmem:[%s1 + $0x20] sm:$0xf]
  %v43 = vld [vmem:[%s1 + $0x24] sm:$0xf]
  %v44 = vld [vmem:[%s1 + $0x28] sm:$0xf]
  %v45 = vld [vmem:[%s1 + $0x2c] sm:$0xf]
  %v46 = vld [vmem:[%s1 + $0x30] sm:$0xf]
  %v47 = vld [vmem:[%s1 + $0x34] sm:$0xf]
  %v48 = vld [vmem:[%s1 + $0x38] sm:$0xf]
  %v49 = vld [vmem:[%s1 + $0x3c] sm:$0xf]
  %v50 = vld [vmem:[%s2] sm:$0x1]
  %v52 = vlaneseq
  %v53 = vshrl.u32 %v52, 7
  %v54 = vsub.s32 0, %v53
  %v55 = vrot.slane %v50, %v54
  %v64 = vunpack.c.l.b16 %v27
  %v65 = vunpack.c.l.b16 %v28
  %v66 = vunpack.c.l.b16 %v29
  %v67 = vunpack.c.l.b16 %v30
  %v68 = vunpack.c.l.b16 %v31
  %v69 = vunpack.c.l.b16 %v32
  %v70 = vunpack.c.l.b16 %v33
  %v71 = vpack.c.b16 %v65, %v64
  %v72 = vpack.c.b16 %v67, %v66
  %v73 = vpack.c.b16 %v69, %v68
  %v74 = vpack.c.b16 %v70, %v70
  %v95 = vunpack.c.l.b16 %v34
  %v96 = vunpack.c.l.b16 %v35
  %v97 = vunpack.c.l.b16 %v36
  %v98 = vunpack.c.l.b16 %v37
  %v99 = vunpack.c.l.b16 %v38
  %v100 = vunpack.c.l.b16 %v39
  %v101 = vunpack.c.l.b16 %v40
  %v102 = vunpack.c.l.b16 %v41
  %v103 = vunpack.c.l.b16 %v42
  %v104 = vunpack.c.l.b16 %v43
  %v105 = vunpack.c.l.b16 %v44
  %v106 = vunpack.c.l.b16 %v45
  %v107 = vunpack.c.l.b16 %v46
  %v108 = vunpack.c.l.b16 %v47
  %v109 = vunpack.c.l.b16 %v48
  %v110 = vunpack.c.l.b16 %v49
  %v111 = vpack.c.b16 %v96, %v95
  %v112 = vpack.c.b16 %v98, %v97
  %v113 = vpack.c.b16 %v100, %v99
  %v114 = vpack.c.b16 %v102, %v101
  %v115 = vpack.c.b16 %v104, %v103
  %v116 = vpack.c.b16 %v106, %v105
  %v117 = vpack.c.b16 %v108, %v107
  %v118 = vpack.c.b16 %v110, %v109
  %127 = vmatprep.subr.bf16.mxu0 0
  %128 = vmatpush1.bf16.msra.mxu0 %v111
  %129 = vmatprep.subr.bf16.mxu0 0
  %130 = vmatpush1.bf16.msra.mxu0 %v112
  %131 = vmatprep.subr.bf16.mxu0 0
  %132 = vmatpush1.bf16.msra.mxu0 %v113
  %133 = vmatprep.subr.bf16.mxu0 0
  %134 = vmatpush1.bf16.msra.mxu0 %v114
  %135 = vmatprep.subr.bf16.mxu0 0
  %136 = vmatpush1.bf16.msra.mxu0 %v115
  %137 = vmatprep.subr.bf16.mxu0 0
  %138 = vmatpush1.bf16.msra.mxu0 %v116
  %139 = vmatprep.subr.bf16.mxu0 0
  %140 = vmatpush1.bf16.msra.mxu0 %v117
  %141 = vmatprep.subr.bf16.mxu0 0
  %142 = vmatpush1.bf16.msra.mxu0 %v118
  %143 = vmatprep.subr.bf16.mxu0 0
  %144 = vmatpush1.bf16.msra.mxu0 0
  %145 = vmatprep.subr.bf16.mxu0 0
  %146 = vmatpush1.bf16.msra.mxu0 0
  %147 = vmatprep.subr.bf16.mxu0 0
  %148 = vmatpush1.bf16.msra.mxu0 0
  %149 = vmatprep.subr.bf16.mxu0 0
  %150 = vmatpush1.bf16.msra.mxu0 0
  %151 = vmatprep.subr.bf16.mxu0 0
  %152 = vmatpush1.bf16.msra.mxu0 0
  %153 = vmatprep.subr.bf16.mxu0 0
  %154 = vmatpush1.bf16.msra.mxu0 0
  %155 = vmatprep.subr.bf16.mxu0 0
  %156 = vmatpush1.bf16.msra.mxu0 0
  %157 = vmatprep.subr.bf16.mxu0 0
  %158 = vmatpush1.bf16.msra.mxu0 0
  %159 = vmatprep.mubr.bf16.mxu0 0
  %160 = vmatmul.mubr.bf16.gmra.mrb[0].mxu0 %v71
  %v161 = vpop.f32.mrb[0].mxu0
  %v162 = vadd.f32 %v55, %v161
  %v163 = vpop.f32.mrb[0].mxu0
  %v164 = vpop.f32.mrb[0].mxu0
  %v165 = vadd.f32 %v55, %v164
  %v166 = vpop.f32.mrb[0].mxu0
  %167 = vmatprep.mubr.bf16.mxu0 0
  %168 = vmatmul.mubr.bf16.gmra.mrb[0].mxu0 %v72
  %v169 = vpop.f32.mrb[0].mxu0
  %v170 = vadd.f32 %v55, %v169
  %v171 = vpop.f32.mrb[0].mxu0
  %v172 = vpop.f32.mrb[0].mxu0
  %v173 = vadd.f32 %v55, %v172
  %v174 = vpop.f32.mrb[0].mxu0
  %175 = vmatprep.mubr.bf16.mxu0 0
  %176 = vmatmul.mubr.bf16.gmra.mrb[0].mxu0 %v73
  %v177 = vpop.f32.mrb[0].mxu0
  %v178 = vadd.f32 %v55, %v177
  %v179 = vpop.f32.mrb[0].mxu0
  %v180 = vpop.f32.mrb[0].mxu0
  %v181 = vadd.f32 %v55, %v180
  %v182 = vpop.f32.mrb[0].mxu0
  %183 = vmatprep.mubr.bf16.mxu0 0
  %184 = vmatmul.mubr.bf16.gmra.mrb[0].mxu0 %v74
  %v185 = vpop.f32.mrb[0].mxu0
  %v186 = vadd.f32 %v55, %v185
  %v187 = vpop.f32.mrb[0].mxu0
  %v188 = vpop.f32.mrb[0].mxu0
  %v189 = vpop.f32.mrb[0].mxu0
  %190 = vdwg.mxu0
  %v191 = vmax.f32 %v162, 0.0
  %v192 = vmax.f32 %v165, 0.0
  %v193 = vmax.f32 %v170, 0.0
  %v194 = vmax.f32 %v173, 0.0
  %v195 = vmax.f32 %v178, 0.0
  %v196 = vmax.f32 %v181, 0.0
  %v197 = vmax.f32 %v186, 0.0
  %v198 = vpack.c.bf16 %v192, %v191
  %v199 = vpack.c.bf16 %v194, %v193
  %v200 = vpack.c.bf16 %v196, %v195
  %v201 = vpack.c.bf16 %v197, %v197
  %v202 = vld [vmem:[%s3] sm:$0xf]
  %v203 = vld [vmem:[%s3 + $0x4] sm:$0xf]
  %v204 = vld [vmem:[%s3 + $0x8] sm:$0xf]
  %v205 = vld [vmem:[%s3 + $0xc] sm:$0xf]
  %v206 = vld [vmem:[%s3 + $0x10] sm:$0xf]
  %v207 = vld [vmem:[%s3 + $0x14] sm:$0xf]
  %v208 = vld [vmem:[%s3 + $0x18] sm:$0xf]
  %v209 = vld [vmem:[%s3 + $0x1c] sm:$0xf]
  %v210 = vld [vmem:[%s3 + $0x20] sm:$0xf]
  %v211 = vld [vmem:[%s3 + $0x24] sm:$0xf]
  %v212 = vld [vmem:[%s3 + $0x28] sm:$0xf]
  %v213 = vld [vmem:[%s3 + $0x2c] sm:$0xf]
  %v214 = vld [vmem:[%s3 + $0x30] sm:$0xf]
  %v215 = vld [vmem:[%s3 + $0x34] sm:$0xf]
  %v216 = vld [vmem:[%s3 + $0x38] sm:$0xf]
  %v217 = vld [vmem:[%s3 + $0x3c] sm:$0xf]
  %v218 = vld [vmem:[%s4] sm:$0x1]
  %v220 = vlaneseq
  %v221 = vshrl.u32 %v220, 7
  %v222 = vsub.s32 0, %v221
  %v223 = vrot.slane %v218, %v222
  %v241 = vunpack.c.l.b16 %v202
  %v242 = vunpack.c.l.b16 %v203
  %v243 = vunpack.c.l.b16 %v204
  %v244 = vunpack.c.l.b16 %v205
  %v245 = vunpack.c.l.b16 %v206
  %v246 = vunpack.c.l.b16 %v207
  %v247 = vunpack.c.l.b16 %v208
  %v248 = vunpack.c.l.b16 %v209
  %v249 = vunpack.c.l.b16 %v210
  %v250 = vunpack.c.l.b16 %v211
  %v251 = vunpack.c.l.b16 %v212
  %v252 = vunpack.c.l.b16 %v213
  %v253 = vunpack.c.l.b16 %v214
  %v254 = vunpack.c.l.b16 %v215
  %v255 = vunpack.c.l.b16 %v216
  %v256 = vunpack.c.l.b16 %v217
  %v257 = vpack.c.b16 %v242, %v241
  %v258 = vpack.c.b16 %v244, %v243
  %v259 = vpack.c.b16 %v246, %v245
  %v260 = vpack.c.b16 %v248, %v247
  %v261 = vpack.c.b16 %v250, %v249
  %v262 = vpack.c.b16 %v252, %v251
  %v263 = vpack.c.b16 %v254, %v253
  %v264 = vpack.c.b16 %v256, %v255
  %273 = vmatprep.subr.bf16.mxu0 0
  %274 = vmatpush1.bf16.msra.mxu0 %v257
  %275 = vmatprep.subr.bf16.mxu0 0
  %276 = vmatpush1.bf16.msra.mxu0 %v258
  %277 = vmatprep.subr.bf16.mxu0 0
  %278 = vmatpush1.bf16.msra.mxu0 %v259
  %279 = vmatprep.subr.bf16.mxu0 0
  %280 = vmatpush1.bf16.msra.mxu0 %v260
  %281 = vmatprep.subr.bf16.mxu0 0
  %282 = vmatpush1.bf16.msra.mxu0 %v261
  %283 = vmatprep.subr.bf16.mxu0 0
  %284 = vmatpush1.bf16.msra.mxu0 %v262
  %285 = vmatprep.subr.bf16.mxu0 0
  %286 = vmatpush1.bf16.msra.mxu0 %v263
  %287 = vmatprep.subr.bf16.mxu0 0
  %288 = vmatpush1.bf16.msra.mxu0 %v264
  %289 = vmatprep.subr.bf16.mxu0 0
  %290 = vmatpush1.bf16.msra.mxu0 0
  %291 = vmatprep.subr.bf16.mxu0 0
  %292 = vmatpush1.bf16.msra.mxu0 0
  %293 = vmatprep.subr.bf16.mxu0 0
  %294 = vmatpush1.bf16.msra.mxu0 0
  %295 = vmatprep.subr.bf16.mxu0 0
  %296 = vmatpush1.bf16.msra.mxu0 0
  %297 = vmatprep.subr.bf16.mxu0 0
  %298 = vmatpush1.bf16.msra.mxu0 0
  %299 = vmatprep.subr.bf16.mxu0 0
  %300 = vmatpush1.bf16.msra.mxu0 0
  %301 = vmatprep.subr.bf16.mxu0 0
  %302 = vmatpush1.bf16.msra.mxu0 0
  %303 = vmatprep.subr.bf16.mxu0 0
  %304 = vmatpush1.bf16.msra.mxu0 0
  %305 = vmatprep.mubr.bf16.mxu0 0
  %306 = vmatmul.mubr.bf16.gmra.mrb[0].mxu0 %v198
  %v307 = vpop.f32.mrb[0].mxu0
  %v308 = vadd.f32 %v223, %v307
  %v309 = vpop.f32.mrb[0].mxu0
  %v310 = vpop.f32.mrb[0].mxu0
  %v311 = vadd.f32 %v223, %v310
  %v312 = vpop.f32.mrb[0].mxu0
  %313 = vmatprep.mubr.bf16.mxu0 0
  %314 = vmatmul.mubr.bf16.gmra.mrb[0].mxu0 %v199
  %v315 = vpop.f32.mrb[0].mxu0
  %v316 = vadd.f32 %v223, %v315
  %v317 = vpop.f32.mrb[0].mxu0
  %v318 = vpop.f32.mrb[0].mxu0
  %v319 = vadd.f32 %v223, %v318
  %v320 = vpop.f32.mrb[0].mxu0
  %321 = vmatprep.mubr.bf16.mxu0 0
  %322 = vmatmul.mubr.bf16.gmra.mrb[0].mxu0 %v200
  %v323 = vpop.f32.mrb[0].mxu0
  %v324 = vadd.f32 %v223, %v323
  %v325 = vpop.f32.mrb[0].mxu0
  %v326 = vpop.f32.mrb[0].mxu0
  %v327 = vadd.f32 %v223, %v326
  %v328 = vpop.f32.mrb[0].mxu0
  %329 = vmatprep.mubr.bf16.mxu0 0
  %330 = vmatmul.mubr.bf16.gmra.mrb[0].mxu0 %v201
  %v331 = vpop.f32.mrb[0].mxu0
  %v332 = vadd.f32 %v223, %v331
  %v333 = vpop.f32.mrb[0].mxu0
  %v334 = vpop.f32.mrb[0].mxu0
  %v335 = vpop.f32.mrb[0].mxu0
  %336 = vdwg.mxu0
  %v337 = vmax.f32 %v308, 0.0
  %v338 = vmax.f32 %v311, 0.0
  %v339 = vmax.f32 %v316, 0.0
  %v340 = vmax.f32 %v319, 0.0
  %v341 = vmax.f32 %v324, 0.0
  %v342 = vmax.f32 %v327, 0.0
  %v343 = vmax.f32 %v332, 0.0
  %v344 = vpack.c.bf16 %v338, %v337
  %v345 = vpack.c.bf16 %v340, %v339
  %v346 = vpack.c.bf16 %v342, %v341
  %v347 = vpack.c.bf16 %v343, %v343
  %v348 = vld [vmem:[%s5] sm:$0xf]
  %v349 = vld [vmem:[%s5 + $0x4] sm:$0xf]
  %v350 = vld [vmem:[%s5 + $0x8] sm:$0xf]
  %v351 = vld [vmem:[%s5 + $0xc] sm:$0xf]
  %v352 = vld [vmem:[%s5 + $0x10] sm:$0xf]
  %v353 = vld [vmem:[%s5 + $0x14] sm:$0xf]
  %v354 = vld [vmem:[%s5 + $0x18] sm:$0xf]
  %v355 = vld [vmem:[%s5 + $0x1c] sm:$0xf]
  %v356 = vld [vmem:[%s5 + $0x20] sm:$0xf]
  %v357 = vld [vmem:[%s5 + $0x24] sm:$0xf]
  %v358 = vld [vmem:[%s5 + $0x28] sm:$0xf]
  %v359 = vld [vmem:[%s5 + $0x2c] sm:$0xf]
  %v360 = vld [vmem:[%s5 + $0x30] sm:$0xf]
  %v361 = vld [vmem:[%s5 + $0x34] sm:$0xf]
  %v362 = vld [vmem:[%s5 + $0x38] sm:$0xf]
  %v363 = vld [vmem:[%s5 + $0x3c] sm:$0xf]
  %v364 = vld [vmem:[%s6] sm:$0x1]
  %v366 = vlaneseq
  %v367 = vshrl.u32 %v366, 7
  %v368 = vsub.s32 0, %v367
  %v369 = vrot.slane %v364, %v368
  %v387 = vunpack.c.l.b16 %v348
  %v388 = vunpack.c.l.b16 %v349
  %v389 = vunpack.c.l.b16 %v350
  %v390 = vunpack.c.l.b16 %v351
  %v391 = vunpack.c.l.b16 %v352
  %v392 = vunpack.c.l.b16 %v353
  %v393 = vunpack.c.l.b16 %v354
  %v394 = vunpack.c.l.b16 %v355
  %v395 = vunpack.c.l.b16 %v356
  %v396 = vunpack.c.l.b16 %v357
  %v397 = vunpack.c.l.b16 %v358
  %v398 = vunpack.c.l.b16 %v359
  %v399 = vunpack.c.l.b16 %v360
  %v400 = vunpack.c.l.b16 %v361
  %v401 = vunpack.c.l.b16 %v362
  %v402 = vunpack.c.l.b16 %v363
  %v403 = vpack.c.b16 %v388, %v387
  %v404 = vpack.c.b16 %v390, %v389
  %v405 = vpack.c.b16 %v392, %v391
  %v406 = vpack.c.b16 %v394, %v393
  %v407 = vpack.c.b16 %v396, %v395
  %v408 = vpack.c.b16 %v398, %v397
  %v409 = vpack.c.b16 %v400, %v399
  %v410 = vpack.c.b16 %v402, %v401
  %419 = vmatprep.subr.bf16.mxu0 0
  %420 = vmatpush1.bf16.msra.mxu0 %v403
  %421 = vmatprep.subr.bf16.mxu0 0
  %422 = vmatpush1.bf16.msra.mxu0 %v404
  %423 = vmatprep.subr.bf16.mxu0 0
  %424 = vmatpush1.bf16.msra.mxu0 %v405
  %425 = vmatprep.subr.bf16.mxu0 0
  %426 = vmatpush1.bf16.msra.mxu0 %v406
  %427 = vmatprep.subr.bf16.mxu0 0
  %428 = vmatpush1.bf16.msra.mxu0 %v407
  %429 = vmatprep.subr.bf16.mxu0 0
  %430 = vmatpush1.bf16.msra.mxu0 %v408
  %431 = vmatprep.subr.bf16.mxu0 0
  %432 = vmatpush1.bf16.msra.mxu0 %v409
  %433 = vmatprep.subr.bf16.mxu0 0
  %434 = vmatpush1.bf16.msra.mxu0 %v410
  %435 = vmatprep.subr.bf16.mxu0 0
  %436 = vmatpush1.bf16.msra.mxu0 0
  %437 = vmatprep.subr.bf16.mxu0 0
  %438 = vmatpush1.bf16.msra.mxu0 0
  %439 = vmatprep.subr.bf16.mxu0 0
  %440 = vmatpush1.bf16.msra.mxu0 0
  %441 = vmatprep.subr.bf16.mxu0 0
  %442 = vmatpush1.bf16.msra.mxu0 0
  %443 = vmatprep.subr.bf16.mxu0 0
  %444 = vmatpush1.bf16.msra.mxu0 0
  %445 = vmatprep.subr.bf16.mxu0 0
  %446 = vmatpush1.bf16.msra.mxu0 0
  %447 = vmatprep.subr.bf16.mxu0 0
  %448 = vmatpush1.bf16.msra.mxu0 0
  %449 = vmatprep.subr.bf16.mxu0 0
  %450 = vmatpush1.bf16.msra.mxu0 0
  %451 = vmatprep.mubr.bf16.mxu0 0
  %452 = vmatmul.mubr.bf16.gmra.mrb[0].mxu0 %v344
  %v453 = vpop.f32.mrb[0].mxu0
  %v454 = vadd.f32 %v369, %v453
  %v455 = vpop.f32.mrb[0].mxu0
  %v456 = vpop.f32.mrb[0].mxu0
  %v457 = vadd.f32 %v369, %v456
  %v458 = vpop.f32.mrb[0].mxu0
  %459 = vmatprep.mubr.bf16.mxu0 0
  %460 = vmatmul.mubr.bf16.gmra.mrb[0].mxu0 %v345
  %v461 = vpop.f32.mrb[0].mxu0
  %v462 = vadd.f32 %v369, %v461
  %v463 = vpop.f32.mrb[0].mxu0
  %v464 = vpop.f32.mrb[0].mxu0
  %v465 = vadd.f32 %v369, %v464
  %v466 = vpop.f32.mrb[0].mxu0
  %467 = vmatprep.mubr.bf16.mxu0 0
  %468 = vmatmul.mubr.bf16.gmra.mrb[0].mxu0 %v346
  %v469 = vpop.f32.mrb[0].mxu0
  %v470 = vadd.f32 %v369, %v469
  %v471 = vpop.f32.mrb[0].mxu0
  %v472 = vpop.f32.mrb[0].mxu0
  %v473 = vadd.f32 %v369, %v472
  %v474 = vpop.f32.mrb[0].mxu0
  %475 = vmatprep.mubr.bf16.mxu0 0
  %476 = vmatmul.mubr.bf16.gmra.mrb[0].mxu0 %v347
  %v477 = vpop.f32.mrb[0].mxu0
  %v478 = vadd.f32 %v369, %v477
  %v479 = vpop.f32.mrb[0].mxu0
  %v480 = vpop.f32.mrb[0].mxu0
  %v481 = vpop.f32.mrb[0].mxu0
  %482 = vdwg.mxu0
  %483 = vst [vmem:[%s7] sm:$0xff] %v454
  %484 = vst [vmem:[%s7 + $0x8] sm:$0xff] %v457
  %485 = vst [vmem:[%s7 + $0x10] sm:$0xff] %v462
  %486 = vst [vmem:[%s7 + $0x18] sm:$0xff] %v465
  %487 = vst [vmem:[%s7 + $0x20] sm:$0xff] %v470
  %488 = vst [vmem:[%s7 + $0x28] sm:$0xff] %v473
  %489 = vst [vmem:[%s7 + $0x30] sm:$0xff] %v478
  // Predicated region
  $region30: #{fc2_forward.1} parent=0 // pred_check
    _
  $region31: #{fc2_forward.1} parent=0 // pred_check_branch
    %491 = sbr.rel (0) target = $region33
  $region32: #{fc2_forward.1} parent=0 // pred_region
    _
  $region33: #{fc2_forward.1} parent=0 // pred_fallthru
    _
  // Predicated region
  $region34: #{fc2_forward.1} parent=0 // pred_check
    _
  $region35: #{fc2_forward.1} parent=0 // pred_check_branch
    %493 = sbr.rel (0) target = $region37
  $region36: #{fc2_forward.1} parent=0 // pred_region
    _
  $region37: #{fc2_forward.1} parent=0 // pred_fallthru
    _

</llo_original>
